<compile_context>
chip_gen: v6e
topology: v6e:2x2x1
jax: 0.10.0
libtpu: 0.0.40
codegen_flags: <defaults>
</compile_context>

<pallas_src>
import functools

import jax
import jax.numpy as jnp
from jax.experimental import pallas as pl
from jax.experimental.pallas import tpu as pltpu


def vnet_kernel(x_ref, w1_ref, p_ref, o_ref):
    # First linear (MXU, bf16 operands, f32 accumulate):  h^T = W1^T @ x^T
    #   w1_ref: (H_pad, S) bf16, x_ref: (S, TB) bf16  ->  h: (H_pad, TB) f32
    h = jnp.dot(w1_ref[...], x_ref[...], preferred_element_type=jnp.float32)
    b1 = p_ref[:, 0:1]          # (H_pad, 1) f32  (row H holds 1.0 for the b2 fold)
    w2 = p_ref[:, 1:2]          # (H_pad, 1) f32  (row H holds b2)
    # Bias + ReLU in f32 on the VPU ((H_pad,1) broadcasts across lanes).
    h = jnp.maximum(h + b1, 0.0)
    # Second linear (80 -> 1) as VPU multiply + sublane (XLU) reduction; the
    # extra row contributes relu(1.0) * b2 = b2, i.e. the output bias.
    v = jnp.sum(h * w2, axis=0, keepdims=True)                 # (1, TB) f32
    o_ref[...] = v.astype(o_ref.dtype)


def _round_up(x, m):
    return (x + m - 1) // m * m


def prepare_params(w1, b1, w2, b2, *, matmul_dtype=jnp.bfloat16):
    """One-time packing of the VNetwork parameters for the Pallas kernel.

    w1: (num_states, H), b1: (H,), w2: (H, 1), b2: (1,)
    Returns (w1_t, packed):
      w1_t:   (H_pad, S) matmul_dtype   — transposed + zero-padded first layer
      packed: (H_pad, 2) f32            — col 0 = b1 (row H = 1.0),
                                          col 1 = w2 (row H = b2)
    Padding rows > H are zero, so they contribute nothing to the reduction.
    """
    S, H = w1.shape
    H_pad = _round_up(H + 1, 8)       # +1 fake hidden unit folds b2 into the sum
    w1_t = jnp.zeros((H_pad, S), matmul_dtype).at[:H, :].set(
        w1.T.astype(matmul_dtype))
    packed = jnp.zeros((H_pad, 2), jnp.float32)
    packed = packed.at[:H, 0].set(b1.astype(jnp.float32))
    packed = packed.at[:H, 1].set(jnp.reshape(w2, (H,)).astype(jnp.float32))
    packed = packed.at[H, 0].set(1.0)                                  # relu(1)=1
    packed = packed.at[H, 1].set(jnp.reshape(b2, ()).astype(jnp.float32))
    return w1_t, packed


def vnetwork_forward_packed(states, w1_t, packed, *, block_b=8192,
                            out_dtype=jnp.float32):
    """states: (B, num_states) f32; (w1_t, packed) from prepare_params().
    Returns (B, 1) — same math as the PyTorch module:
    relu(states @ w1 + b1) @ w2 + b2 (first matmul in bf16, f32 epilogue)."""
    B, S = states.shape
    H_pad = w1_t.shape[0]
    assert w1_t.shape[1] == S, "states feature dim must match packed w1"

    # ---- lane-axis batch tiling (wrapper-side Python, pre-trace) ----
    B128 = _round_up(B, 128)
    TB = min(B128, block_b)
    # Large batch with a single grid step: split into (at least) two steps so
    # the "parallel" axis shards across v7x's two TensorCores.
    if B128 >= 4096 and B128 // TB < 2:
        TB = _round_up((B128 + 1) // 2, 128)
    B_pad = _round_up(B128, TB)

    # Transpose + cast (fuses under jit); pad only when actually needed —
    # no zeros().at[].set() round trip through HBM.
    x_t = states.T.astype(w1_t.dtype)                 # (S, B) bf16
    if B_pad != B:
        x_t = jnp.pad(x_t, ((0, 0), (0, B_pad - B)))  # (S, B_pad)

    grid = (B_pad // TB,)
    out = pl.pallas_call(
        vnet_kernel,
        out_shape=jax.ShapeDtypeStruct((1, B_pad), out_dtype),
        grid=grid,
        in_specs=[
            # Streamed activations: batch tile on the lane axis.
            pl.BlockSpec((S, TB), lambda i: (0, i)),
            # Resident weights / packed bias block (same tile every step).
            pl.BlockSpec((H_pad, S), lambda i: (0, 0)),
            pl.BlockSpec((H_pad, 2), lambda i: (0, 0)),
        ],
        out_specs=pl.BlockSpec((1, TB), lambda i: (0, i)),
        compiler_params=pltpu.CompilerParams(
            dimension_semantics=("parallel",)),
    )(x_t, w1_t, packed)

    # Back to the PyTorch (B, 1) convention; drop batch padding.
    return out[0, :B].reshape(B, 1)


def vnetwork_forward(states, w1, b1, w2, b2, **kwargs):
    """Convenience one-shot API (packs params every call). Prefer
    prepare_params() + vnetwork_forward_packed() in a training loop."""
    w1_t, packed = prepare_params(w1, b1, w2, b2)
    return vnetwork_forward_packed(states, w1_t, packed, **kwargs)


def init_params(key, num_states, hdim=80):
    """Deterministic init mimicking torch.nn.Linear defaults
    (uniform(-1/sqrt(fan_in), 1/sqrt(fan_in))).  Weights stored as [in, out]."""
    k1, k2, k3, k4 = jax.random.split(key, 4)
    bound1 = 1.0 / jnp.sqrt(num_states)
    bound2 = 1.0 / jnp.sqrt(hdim)
    w1 = jax.random.uniform(k1, (num_states, hdim), jnp.float32, -bound1, bound1)
    b1 = jax.random.uniform(k2, (hdim,), jnp.float32, -bound1, bound1)
    w2 = jax.random.uniform(k3, (hdim, 1), jnp.float32, -bound2, bound2)
    b2 = jax.random.uniform(k4, (1,), jnp.float32, -bound2, bound2)
    return w1, b1, w2, b2


if __name__ == "__main__":
    key = jax.random.PRNGKey(0)
    k_params, k_x, k_x2 = jax.random.split(key, 3)

    num_states = 4   # CartPole observation dim
    batch = 8
    hdim = 80

    w1, b1, w2, b2 = init_params(k_params, num_states, hdim)
    states = jax.random.normal(k_x, (batch, num_states), jnp.float32)

    # Pack weights once; jit the forward so transpose/cast/pad fuse with the call.
    w1_t, packed = prepare_params(w1, b1, w2, b2)
    fwd = jax.jit(functools.partial(vnetwork_forward_packed))

    out = jax.block_until_ready(fwd(states, w1_t, packed))
    assert out.shape == (batch, 1)

    # Matched-precision reference (bf16 MXU operands, f32 accumulate / epilogue).
    h_ref = jnp.maximum(
        jnp.dot(states.astype(jnp.bfloat16), w1.astype(jnp.bfloat16),
                preferred_element_type=jnp.float32) + b1, 0.0)
    ref = h_ref @ w2 + b2
    assert jnp.allclose(out, ref, atol=1e-4, rtol=1e-4)

    # Sanity vs. the pure-f32 PyTorch-equivalent math (only bf16 operand
    # rounding of the first matmul separates the two).
    ref32 = jnp.maximum(states @ w1 + b1, 0.0) @ w2 + b2
    assert jnp.allclose(out, ref32, atol=5e-2, rtol=5e-2)

    # Second call at a non-multiple-of-128 batch to exercise padding + slicing.
    batch2 = 300
    states2 = jax.random.normal(k_x2, (batch2, num_states), jnp.float32)
    out2 = jax.block_until_ready(fwd(states2, w1_t, packed))
    assert out2.shape == (batch2, 1)
    h2 = jnp.maximum(
        jnp.dot(states2.astype(jnp.bfloat16), w1.astype(jnp.bfloat16),
                preferred_element_type=jnp.float32) + b1, 0.0)
    ref2 = h2 @ w2 + b2
    assert jnp.allclose(out2, ref2, atol=1e-4, rtol=1e-4)

    print("KERNEL_OK")
</pallas_src>

<mosaic_0001>
module attributes {stable_mosaic.version = 11 : i64} {
  func.func @vnet_kernel(%arg0: i32, %arg1: memref<4x128xbf16, #tpu.memory_space<vmem>>, %arg2: memref<88x4xbf16, #tpu.memory_space<vmem>>, %arg3: memref<88x2xf32, #tpu.memory_space<vmem>>, %arg4: memref<1x128xf32, #tpu.memory_space<vmem>>) attributes {dimension_semantics = [#tpu.dimension_semantics<parallel>], iteration_bounds = array<i64: 1>, scalar_prefetch = 0 : i64, scratch_operands = 0 : i64, tpu.core_type = #tpu.core_type<tc>, window_params = [{transform_indices = @transform_0, window_bounds = array<i64: 4, 128>}, {pipeline_mode = #tpu.pipeline_mode<synchronous>, transform_indices = @transform_1, window_bounds = array<i64: 88, 4>}, {pipeline_mode = #tpu.pipeline_mode<synchronous>, transform_indices = @transform_2, window_bounds = array<i64: 88, 2>}, {transform_indices = @transform_3, window_bounds = array<i64: 1, 128>}]} {
    %c0 = arith.constant 0 : index
    %c0_0 = arith.constant 0 : index
    %0 = vector.load %arg2[%c0, %c0_0] : memref<88x4xbf16, #tpu.memory_space<vmem>>, vector<88x4xbf16>
    %c0_1 = arith.constant 0 : index
    %c0_2 = arith.constant 0 : index
    %1 = vector.load %arg1[%c0_1, %c0_2] : memref<4x128xbf16, #tpu.memory_space<vmem>>, vector<4x128xbf16>
    %cst = arith.constant dense<0.000000e+00> : vector<88x128xf32>
    %2 = tpu.matmul %0, %1, %cst {dimension_numbers = #tpu.dot_dimension_numbers<[1], [0], [0], [1], [0, 0, 1, 1], [], []>} : vector<88x4xbf16>, vector<4x128xbf16>, vector<88x128xf32> -> vector<88x128xf32>
    %c0_3 = arith.constant 0 : index
    %c0_4 = arith.constant 0 : index
    %3 = vector.load %arg3[%c0_3, %c0_4] : memref<88x2xf32, #tpu.memory_space<vmem>>, vector<88x1xf32>
    %c0_5 = arith.constant 0 : index
    %c1 = arith.constant 1 : index
    %4 = vector.load %arg3[%c0_5, %c1] : memref<88x2xf32, #tpu.memory_space<vmem>>, vector<88x1xf32>
    %5 = vector.broadcast %3 : vector<88x1xf32> to vector<88x128xf32>
    %6 = arith.addf %2, %5 : vector<88x128xf32>
    %cst_6 = arith.constant 0.000000e+00 : f32
    %7 = vector.broadcast %cst_6 : f32 to vector<88x128xf32>
    %8 = arith.maximumf %6, %7 : vector<88x128xf32>
    %9 = vector.broadcast %4 : vector<88x1xf32> to vector<88x128xf32>
    %10 = arith.mulf %8, %9 : vector<88x128xf32>
    %cst_7 = arith.constant dense<0.000000e+00> : vector<128xf32>
    %11 = vector.multi_reduction <add>, %10, %cst_7 [0] : vector<88x128xf32> to vector<128xf32>
    %12 = vector.shape_cast %11 : vector<128xf32> to vector<1x128xf32>
    %c0_8 = arith.constant 0 : index
    %c0_9 = arith.constant 0 : index
    %13 = vector.load %arg4[%c0_8, %c0_9] : memref<1x128xf32, #tpu.memory_space<vmem>>, vector<1x128xf32>
    tpu.vector_store %arg4[%c0_8, %c0_9], %12 {strides = array<i32>} : memref<1x128xf32, #tpu.memory_space<vmem>>, vector<1x128xf32>,
    return
  }
  func.func @transform_0(%arg0: i32) -> (i32, i32) {
    %c0_i32 = arith.constant 0 : i32
    %c0_i32_0 = arith.constant 0 : i32
    return %c0_i32, %arg0 : i32, i32
  }
  func.func @transform_1(%arg0: i32) -> (i32, i32) {
    %c0_i32 = arith.constant 0 : i32
    %c0_i32_0 = arith.constant 0 : i32
    %c0_i32_1 = arith.constant 0 : i32
    return %c0_i32, %c0_i32_0 : i32, i32
  }
  func.func @transform_2(%arg0: i32) -> (i32, i32) {
    %c0_i32 = arith.constant 0 : i32
    %c0_i32_0 = arith.constant 0 : i32
    %c0_i32_1 = arith.constant 0 : i32
    return %c0_i32, %c0_i32_0 : i32, i32
  }
  func.func @transform_3(%arg0: i32) -> (i32, i32) {
    %c0_i32 = arith.constant 0 : i32
    %c0_i32_0 = arith.constant 0 : i32
    return %c0_i32, %arg0 : i32, i32
  }
}

</mosaic_0001>

<llo_original>
// kernel: vnetwork_forward_packed.1
$region0: #{vnetwork_forward_packed.1}
  #allocation0 [shape = 'u32[]', space=smem, size = 0x4, offset = 0x4, fixed_abs, tag = 'smem constant byte address 0x4 - core index']
  #allocation1 [shape = 'u32[144,128]{1,0:T(1,128)}', space=vmem, size = 0x12000, scoped, tag = 'internal scratch']
  %s0 = inlined_call_operand.vmem [shape: bf16[4,128], index: 0, kind: input, shape index: {}]
  %s1 = inlined_call_operand.vmem [shape: bf16[88,4], index: 1, kind: input, shape index: {}]
  %s2 = inlined_call_operand.vmem [shape: f32[88,2], index: 2, kind: input, shape index: {}]
  %s3 = inlined_call_operand.vmem [shape: f32[1,128], index: 3, kind: output, shape index: {}]
  %s4 = sld [smem:[#allocation0]]
  $region22: #{vnetwork_forward_packed.1} parent=0
    _
  %s6 = ssub.s32 1, %s4
  %s7 = scalar_select 0, %s6, %s4
  // Predicated region
  $region2: #{vnetwork_forward_packed.1} parent=0 // pred_check
    _
  $region3: #{vnetwork_forward_packed.1} parent=0 // pred_check_branch
    %9 = sbr.rel (0) target = $region5
  $region4: #{vnetwork_forward_packed.1} parent=0 // pred_region
    _
  $region5: #{vnetwork_forward_packed.1} parent=0 // pred_fallthru
    _
  // Predicated region
  $region6: #{vnetwork_forward_packed.1} parent=0 // pred_check
    _
  $region7: #{vnetwork_forward_packed.1} parent=0 // pred_check_branch
    %11 = sbr.rel (0) target = $region9
  $region8: #{vnetwork_forward_packed.1} parent=0 // pred_region
    _
  $region9: #{vnetwork_forward_packed.1} parent=0 // pred_fallthru
    _
  // Predicated region
  $region10: #{vnetwork_forward_packed.1} parent=0 // pred_check
    _
  $region11: #{vnetwork_forward_packed.1} parent=0 // pred_check_branch
    %13 = sbr.rel (0) target = $region13
  $region12: #{vnetwork_forward_packed.1} parent=0 // pred_region
    _
  $region13: #{vnetwork_forward_packed.1} parent=0 // pred_fallthru
    _
  %v15 = vld [vmem:[%s1] sm:$0xf]
  %v16 = vld [vmem:[%s1 + $0x4] sm:$0xf]
  %v17 = vld [vmem:[%s1 + $0x8] sm:$0xf]
  %v18 = vld [vmem:[%s1 + $0xc] sm:$0xf]
  %v19 = vld [vmem:[%s1 + $0x10] sm:$0xf]
  %v20 = vld [vmem:[%s1 + $0x14] sm:$0xf]
  %v21 = vld [vmem:[%s1 + $0x18] sm:$0xf]
  %v22 = vld [vmem:[%s1 + $0x1c] sm:$0xf]
  %v23 = vld [vmem:[%s1 + $0x20] sm:$0xf]
  %v24 = vld [vmem:[%s1 + $0x24] sm:$0xf]
  %v25 = vld [vmem:[%s1 + $0x28] sm:$0xf]
  %v26 = vld [vmem:[%s0] sm:$0x3]
  %v27 = vld [vmem:[%s2] sm:$0xff]
  %v28 = vld [vmem:[%s2 + $0x8] sm:$0xff]
  %v29 = vld [vmem:[%s2 + $0x10] sm:$0xff]
  %v30 = vld [vmem:[%s2 + $0x18] sm:$0xff]
  %v31 = vld [vmem:[%s2 + $0x20] sm:$0xff]
  %v32 = vld [vmem:[%s2 + $0x28] sm:$0xff]
  %v33 = vld [vmem:[%s2 + $0x30] sm:$0xff]
  %v34 = vld [vmem:[%s2 + $0x38] sm:$0xff]
  %v35 = vld [vmem:[%s2 + $0x40] sm:$0xff]
  %v36 = vld [vmem:[%s2 + $0x48] sm:$0xff]
  %v37 = vld [vmem:[%s2 + $0x50] sm:$0xff]
  %39 = vset.pattern.permute.xlu0 0
  %40 = vperm.xlu0 %39, %v27
  %v41 = vpop.permute.xlu0 %40
  %44 = vset.pattern.permute.xlu0 0
  %45 = vperm.xlu0 %44, %v28
  %v46 = vpop.permute.xlu0 %45
  %49 = vset.pattern.permute.xlu0 0
  %50 = vperm.xlu0 %49, %v29
  %v51 = vpop.permute.xlu0 %50
  %54 = vset.pattern.permute.xlu0 0
  %55 = vperm.xlu0 %54, %v30
  %v56 = vpop.permute.xlu0 %55
  %59 = vset.pattern.permute.xlu0 0
  %60 = vperm.xlu0 %59, %v31
  %v61 = vpop.permute.xlu0 %60
  %64 = vset.pattern.permute.xlu0 0
  %65 = vperm.xlu0 %64, %v32
  %v66 = vpop.permute.xlu0 %65
  %69 = vset.pattern.permute.xlu0 0
  %70 = vperm.xlu0 %69, %v33
  %v71 = vpop.permute.xlu0 %70
  %74 = vset.pattern.permute.xlu0 0
  %75 = vperm.xlu0 %74, %v34
  %v76 = vpop.permute.xlu0 %75
  %79 = vset.pattern.permute.xlu0 0
  %80 = vperm.xlu0 %79, %v35
  %v81 = vpop.permute.xlu0 %80
  %84 = vset.pattern.permute.xlu0 0
  %85 = vperm.xlu0 %84, %v36
  %v86 = vpop.permute.xlu0 %85
  %89 = vset.pattern.permute.xlu0 0
  %90 = vperm.xlu0 %89, %v37
  %v91 = vpop.permute.xlu0 %90
  %v104 = vunpack.c.l.b16 %v15
  %v105 = vunpack.c.l.b16 %v16
  %v106 = vunpack.c.l.b16 %v17
  %v107 = vunpack.c.l.b16 %v18
  %v108 = vunpack.c.l.b16 %v19
  %v109 = vunpack.c.l.b16 %v20
  %v110 = vunpack.c.l.b16 %v21
  %v111 = vunpack.c.l.b16 %v22
  %v112 = vunpack.c.l.b16 %v23
  %v113 = vunpack.c.l.b16 %v24
  %v114 = vunpack.c.l.b16 %v25
  %v115 = vpack.c.b16 %v105, %v104
  %v116 = vpack.c.b16 %v107, %v106
  %v117 = vpack.c.b16 %v109, %v108
  %v118 = vpack.c.b16 %v111, %v110
  %v119 = vpack.c.b16 %v113, %v112
  %v120 = vpack.c.b16 %v114, %v114
  %vm121 = vcmask 31744
  %v123 = vsel %vm121, %v115, 0
  %v126 = vsel %vm121, %v116, 0
  %v129 = vsel %vm121, %v117, 0
  %v132 = vsel %vm121, %v118, 0
  %v135 = vsel %vm121, %v119, 0
  %v138 = vsel %vm121, %v120, 0
  %vm140 = vcmask 1041408
  %v142 = vsel %vm140, %v26, 0
  %144 = vmatprep.subr.bf16.mxu0 0
  %145 = vmatpush1.bf16.msra.mxu0 0
  %146 = vmatprep.subr.bf16.mxu0 0
  %147 = vmatpush1.bf16.msra.mxu0 0
  %148 = vmatprep.subr.bf16.mxu0 0
  %149 = vmatpush1.bf16.msra.mxu0 0
  %150 = vmatprep.subr.bf16.mxu0 0
  %151 = vmatpush1.bf16.msra.mxu0 0
  %152 = vmatprep.subr.bf16.mxu0 0
  %153 = vmatpush1.bf16.msra.mxu0 0
  %154 = vmatprep.subr.bf16.mxu0 0
  %155 = vmatpush1.bf16.msra.mxu0 0
  %156 = vmatprep.subr.bf16.mxu0 0
  %157 = vmatpush1.bf16.msra.mxu0 0
  %158 = vmatprep.subr.bf16.mxu0 0
  %159 = vmatpush1.bf16.msra.mxu0 %v142
  %160 = vmatprep.subr.bf16.mxu0 0
  %161 = vmatpush2.bf16.msra.mxu0 0
  %162 = vmatprep.subr.bf16.mxu0 0
  %163 = vmatpush2.bf16.msra.mxu0 0
  %164 = vmatprep.subr.bf16.mxu0 0
  %165 = vmatpush2.bf16.msra.mxu0 0
  %166 = vmatprep.subr.bf16.mxu0 0
  %167 = vmatpush2.bf16.msra.mxu0 0
  %168 = vmatprep.subr.bf16.mxu0 0
  %169 = vmatpush2.bf16.msra.mxu0 0
  %170 = vmatprep.subr.bf16.mxu0 0
  %171 = vmatpush2.bf16.msra.mxu0 0
  %172 = vmatprep.subr.bf16.mxu0 0
  %173 = vmatpush2.bf16.msra.mxu0 0
  %174 = vmatprep.subr.bf16.mxu0 0
  %175 = vmatpush2.bf16.msra.mxu0 0
  %176 = vmatprep.mubr.bf16.mxu0 0
  %177 = vmatmul.mubr.bf16.gmra.mxu0 %v123
  %v178 = vpop.f32.mrf.mxu0
  %v179 = vadd.f32 %v41, %v178
  %v180 = vpop.f32.mrf.mxu0
  %v181 = vpop.f32.mrf.mxu0
  %v182 = vadd.f32 %v46, %v181
  %v183 = vpop.f32.mrf.mxu0
  %184 = vmatprep.mubr.bf16.mxu0 0
  %185 = vmatmul.mubr.bf16.gmra.mxu0 %v126
  %v186 = vpop.f32.mrf.mxu0
  %v187 = vadd.f32 %v51, %v186
  %v188 = vpop.f32.mrf.mxu0
  %v189 = vpop.f32.mrf.mxu0
  %v190 = vadd.f32 %v56, %v189
  %v191 = vpop.f32.mrf.mxu0
  %192 = vmatprep.mubr.bf16.mxu0 0
  %193 = vmatmul.mubr.bf16.gmra.mxu0 %v129
  %v194 = vpop.f32.mrf.mxu0
  %v195 = vadd.f32 %v61, %v194
  %v196 = vpop.f32.mrf.mxu0
  %v197 = vpop.f32.mrf.mxu0
  %v198 = vadd.f32 %v66, %v197
  %v199 = vpop.f32.mrf.mxu0
  %200 = vmatprep.mubr.bf16.mxu0 0
  %201 = vmatmul.mubr.bf16.gmra.mxu0 %v132
  %v202 = vpop.f32.mrf.mxu0
  %v203 = vadd.f32 %v71, %v202
  %v204 = vpop.f32.mrf.mxu0
  %v205 = vpop.f32.mrf.mxu0
  %v206 = vadd.f32 %v76, %v205
  %v207 = vpop.f32.mrf.mxu0
  %208 = vmatprep.mubr.bf16.mxu0 0
  %209 = vmatmul.mubr.bf16.gmra.mxu0 %v135
  %v210 = vpop.f32.mrf.mxu0
  %v211 = vadd.f32 %v81, %v210
  %v212 = vpop.f32.mrf.mxu0
  %v213 = vpop.f32.mrf.mxu0
  %v214 = vadd.f32 %v86, %v213
  %v215 = vpop.f32.mrf.mxu0
  %216 = vmatprep.mubr.bf16.mxu0 0
  %217 = vmatmul.mubr.bf16.gmra.mxu0 %v138
  %v218 = vpop.f32.mrf.mxu0
  %v219 = vadd.f32 %v91, %v218
  %v220 = vpop.f32.mrf.mxu0
  %v221 = vpop.f32.mrf.mxu0
  %v222 = vpop.f32.mrf.mxu0
  %223 = vdwg.mxu0
  %v224 = vmax.f32 %v179, 0.0
  %v225 = vmax.f32 %v182, 0.0
  %v226 = vmax.f32 %v187, 0.0
  %v227 = vmax.f32 %v190, 0.0
  %v228 = vmax.f32 %v195, 0.0
  %v229 = vmax.f32 %v198, 0.0
  %v230 = vmax.f32 %v203, 0.0
  %v231 = vmax.f32 %v206, 0.0
  %v232 = vmax.f32 %v211, 0.0
  %v233 = vmax.f32 %v214, 0.0
  %v234 = vmax.f32 %v219, 0.0
  %235 = vset.pattern.permute.xlu0 1
  %236 = vperm.xlu0 %235, %v27
  %v237 = vpop.permute.xlu0 %236
  %239 = vset.pattern.permute.xlu0 1
  %240 = vperm.xlu0 %239, %v28
  %v241 = vpop.permute.xlu0 %240
  %243 = vset.pattern.permute.xlu0 1
  %244 = vperm.xlu0 %243, %v29
  %v245 = vpop.permute.xlu0 %244
  %247 = vset.pattern.permute.xlu0 1
  %248 = vperm.xlu0 %247, %v30
  %v249 = vpop.permute.xlu0 %248
  %251 = vset.pattern.permute.xlu0 1
  %252 = vperm.xlu0 %251, %v31
  %v253 = vpop.permute.xlu0 %252
  %255 = vset.pattern.permute.xlu0 1
  %256 = vperm.xlu0 %255, %v32
  %v257 = vpop.permute.xlu0 %256
  %259 = vset.pattern.permute.xlu0 1
  %260 = vperm.xlu0 %259, %v33
  %v261 = vpop.permute.xlu0 %260
  %263 = vset.pattern.permute.xlu0 1
  %264 = vperm.xlu0 %263, %v34
  %v265 = vpop.permute.xlu0 %264
  %267 = vset.pattern.permute.xlu0 1
  %268 = vperm.xlu0 %267, %v35
  %v269 = vpop.permute.xlu0 %268
  %271 = vset.pattern.permute.xlu0 1
  %272 = vperm.xlu0 %271, %v36
  %v273 = vpop.permute.xlu0 %272
  %275 = vset.pattern.permute.xlu0 1
  %276 = vperm.xlu0 %275, %v37
  %v277 = vpop.permute.xlu0 %276
  %v279 = vmul.f32 %v224, %v237
  %v280 = vmul.f32 %v225, %v241
  %v281 = vmul.f32 %v226, %v245
  %v282 = vmul.f32 %v227, %v249
  %v283 = vmul.f32 %v228, %v253
  %v284 = vmul.f32 %v229, %v257
  %v285 = vmul.f32 %v230, %v261
  %v286 = vmul.f32 %v231, %v265
  %v287 = vmul.f32 %v232, %v269
  %v288 = vmul.f32 %v233, %v273
  %v289 = vmul.f32 %v234, %v277
  %v290 = vadd.f32 %v279, %v280
  %v291 = vadd.f32 %v290, %v281
  %v292 = vadd.f32 %v291, %v282
  %v293 = vadd.f32 %v292, %v283
  %v294 = vadd.f32 %v293, %v284
  %v295 = vadd.f32 %v294, %v285
  %v296 = vadd.f32 %v295, %v286
  %v297 = vadd.f32 %v296, %v287
  %v298 = vadd.f32 %v297, %v288
  %v299 = vadd.f32 %v298, %v289
  %v300 = vrot.slane %v299, 4
  %v301 = vadd.f32 %v299, %v300
  %v302 = vrot.slane %v301, 2
  %v303 = vadd.f32 %v301, %v302
  %v304 = vrot.slane %v303, 1
  %v305 = vadd.f32 %v303, %v304
  %306 = vst [vmem:[%s3] sm:$0x1] %v305
  // Predicated region
  $region14: #{vnetwork_forward_packed.1} parent=0 // pred_check
    _
  $region15: #{vnetwork_forward_packed.1} parent=0 // pred_check_branch
    %308 = sbr.rel (0) target = $region17
  $region16: #{vnetwork_forward_packed.1} parent=0 // pred_region
    _
  $region17: #{vnetwork_forward_packed.1} parent=0 // pred_fallthru
    _
  // Predicated region
  $region18: #{vnetwork_forward_packed.1} parent=0 // pred_check
    _
  $region19: #{vnetwork_forward_packed.1} parent=0 // pred_check_branch
    %310 = sbr.rel (0) target = $region21
  $region20: #{vnetwork_forward_packed.1} parent=0 // pred_region
    _
  $region21: #{vnetwork_forward_packed.1} parent=0 // pred_fallthru
    _

</llo_original>
